<compile_context>
chip_gen: v6e
topology: v6e:2x2x1
jax: 0.10.0
libtpu: 0.0.40
codegen_flags: <defaults>
</compile_context>

<pallas_src>
import functools

import jax
import jax.numpy as jnp
from jax.experimental import pallas as pl
from jax.experimental.pallas import tpu as pltpu


# ----------------------------- Pallas kernels ------------------------------

def _linear_kernel(x_ref, w_ref, b_ref, o_ref):
    o_ref[...] = (jnp.dot(x_ref[...].astype(jnp.bfloat16),
                          w_ref[...].astype(jnp.bfloat16),
                          preferred_element_type=jnp.float32) + b_ref[...])


def pallas_linear(x, w, b, *, row_tile=256):
    """(N, F) @ (F, P) + (1, P).  P is lane-padded (multiple of 128).

    Tiles over rows with a "parallel" grid once N is big enough (megacore + DMA
    overlap); single block otherwise (toy shapes).
    """
    N, F = x.shape
    P = w.shape[1]
    out_shape = jax.ShapeDtypeStruct((N, P), jnp.float32)
    if N >= 2 * row_tile and N % row_tile == 0:
        return pl.pallas_call(
            _linear_kernel,
            out_shape=out_shape,
            grid=(N // row_tile,),
            in_specs=[pl.BlockSpec((row_tile, F), lambda i: (i, 0)),
                      pl.BlockSpec((F, P), lambda i: (0, 0)),
                      pl.BlockSpec((1, P), lambda i: (0, 0))],
            out_specs=pl.BlockSpec((row_tile, P), lambda i: (i, 0)),
            compiler_params=pltpu.CompilerParams(
                dimension_semantics=("parallel",)),
        )(x, w, b)
    return pl.pallas_call(
        _linear_kernel,
        out_shape=out_shape,
        in_specs=[pl.BlockSpec((N, F), lambda: (0, 0)),
                  pl.BlockSpec((F, P), lambda: (0, 0)),
                  pl.BlockSpec((1, P), lambda: (0, 0))],
        out_specs=pl.BlockSpec((N, P), lambda: (0, 0)),
    )(x, w, b)


def _lstm_scan_kernel(xg_ref, m_ref, whh_ref, h0_ref, c0_ref,
                      out_ref, hn_ref, cn_ref, *, hp, reverse_dir1):
    """Full LSTM time loop for one direction (one grid point) inside one invocation.

    xg : (S, B, 4*hp)  precomputed x @ W_ih + b (fused gates i, f, g, o), this direction
    m  : (S, B, 1)     1.0 where (t, b) is a valid (packed) position, else 0.0
    whh: (hp, 4*hp)    fused recurrent weights, this direction
    Direction 1 (if reverse_dir1) scans time in reverse fully in-kernel: no host flips.
    """
    S = xg_ref.shape[0]
    whh = whh_ref[...].astype(jnp.bfloat16)          # hoisted cast (once per call)
    if reverse_dir1:
        is_rev = pl.program_id(0) == 1

    def step(t, carry):
        h, c = carry
        if reverse_dir1:
            tt = jnp.where(is_rev, S - 1 - t, t)
        else:
            tt = t
        gates = xg_ref[tt] + jnp.dot(h.astype(jnp.bfloat16), whh,
                                     preferred_element_type=jnp.float32)
        i_g = jax.nn.sigmoid(gates[:, 0 * hp:1 * hp])
        f_g = jax.nn.sigmoid(gates[:, 1 * hp:2 * hp])
        g_g = jnp.tanh(gates[:, 2 * hp:3 * hp])
        o_g = jax.nn.sigmoid(gates[:, 3 * hp:4 * hp])
        c_new = f_g * c + i_g * g_g
        h_new = o_g * jnp.tanh(c_new)
        keep = m_ref[tt] > 0.0
        # pad_packed_sequence zero-fills outputs past each sequence's length.
        out_ref[tt] = jnp.where(keep, h_new, jnp.zeros_like(h_new))
        return (jnp.where(keep, h_new, h), jnp.where(keep, c_new, c))

    unroll = S if S <= 8 else 8                       # partial unroll at realistic S
    h_fin, c_fin = jax.lax.fori_loop(0, S, step, (h0_ref[...], c0_ref[...]),
                                     unroll=unroll)
    hn_ref[...] = h_fin
    cn_ref[...] = c_fin


def lstm_scan(xg, mask, whh, h0, c0, *, hp, num_dirs=1, reverse_dir1=False):
    """Single-layer LSTM(s) over a padded time-major batch (packed-sequence semantics).

    xg  : (S, B, num_dirs*4*hp)   direction d uses column block d (BlockSpec-selected)
    whh : (hp, num_dirs*4*hp)
    Grid is the direction axis, marked "parallel" (v7x megacore: fwd/bwd on separate TCs).
    """
    S, B, g_all = xg.shape
    G = 4 * hp
    assert g_all == num_dirs * G
    return pl.pallas_call(
        functools.partial(_lstm_scan_kernel, hp=hp, reverse_dir1=reverse_dir1),
        out_shape=(jax.ShapeDtypeStruct((num_dirs, S, B, hp), jnp.float32),
                   jax.ShapeDtypeStruct((num_dirs, B, hp), jnp.float32),
                   jax.ShapeDtypeStruct((num_dirs, B, hp), jnp.float32)),
        grid=(num_dirs,),
        in_specs=[pl.BlockSpec((S, B, G), lambda d: (0, 0, d)),
                  pl.BlockSpec((S, B, 1), lambda d: (0, 0, 0)),
                  pl.BlockSpec((hp, G), lambda d: (0, d)),
                  pl.BlockSpec((B, hp), lambda d: (0, 0)),
                  pl.BlockSpec((B, hp), lambda d: (0, 0))],
        out_specs=(pl.BlockSpec((None, S, B, hp), lambda d: (d, 0, 0, 0)),
                   pl.BlockSpec((None, B, hp), lambda d: (d, 0, 0)),
                   pl.BlockSpec((None, B, hp), lambda d: (d, 0, 0))),
        compiler_params=pltpu.CompilerParams(dimension_semantics=("parallel",)),
    )(xg, mask, whh, h0, c0)
    # TODO(synk): at large S, tile the time axis ("arbitrary" grid dim, h/c in VMEM
    # scratch) so the (S,B,4*hp) xg block fits v7x's 64 MiB VMEM.


def _attention_kernel(eproj_ref, enc_ref, dproj_ref, v_ref, nmask_ref, out_ref):
    """Additive attention for ONE decoder step (one grid point).

    eproj : (B, S, W)  We(enc)+bias, batch-major so softmax reduces over the lane axis
    enc   : (B, S, E)  encoder contexts (lane-padded)
    dproj : (B, W)     Wd(dec) for this decoder step (hoisted matmul)
    v     : (1, W)     scoring vector (padded lanes are zero)
    nmask : (B, S)     additive mask: 0 where valid, -1e30 at padded source positions
    out   : (B, E)
    """
    d = dproj_ref[...]                                             # (B, W)
    s = jnp.tanh(eproj_ref[...] + d[:, None, :])                   # (B, S, W)
    v = v_ref[...]                                                 # (1, W)
    scores = jnp.sum(s * v[None, :, :], axis=-1) + nmask_ref[...]  # (B, S)
    m = jnp.max(scores, axis=-1, keepdims=True)
    e = jnp.exp(scores - m)
    wgt = e * pl.reciprocal(jnp.sum(e, axis=-1, keepdims=True), approx=True)
    # weighted context on the MXU: batched dot contracting S (was a VPU sum before)
    out_ref[...] = jax.lax.dot_general(
        wgt, enc_ref[...],
        dimension_numbers=(((1,), (1,)), ((0,), (0,))),
        preferred_element_type=jnp.float32)                        # (B, E)


def pallas_attention(eproj_bsw, enc_bse, dproj, v_w, nmask):
    B, S, W = eproj_bsw.shape
    E = enc_bse.shape[-1]
    T = dproj.shape[0]
    return pl.pallas_call(
        _attention_kernel,
        out_shape=jax.ShapeDtypeStruct((T, B, E), jnp.float32),
        grid=(T,),
        in_specs=[pl.BlockSpec((B, S, W), lambda t: (0, 0, 0)),   # resident
                  pl.BlockSpec((B, S, E), lambda t: (0, 0, 0)),   # resident
                  pl.BlockSpec((None, B, W), lambda t: (t, 0, 0)),
                  pl.BlockSpec((1, W), lambda t: (0, 0)),
                  pl.BlockSpec((B, S), lambda t: (0, 0))],
        out_specs=pl.BlockSpec((None, B, E), lambda t: (t, 0, 0)),
        compiler_params=pltpu.CompilerParams(dimension_semantics=("parallel",)),
    )(eproj_bsw, enc_bse, dproj, v_w, nmask)


def _head_kernel(a_ref, d_ref, wta_ref, wtd_ref, bt_ref, wp_ref, bp_ref, lbl_ref,
                 loss_ref, *, v_logical, pad_idx):
    """relu(transform) -> projection -> masked-mean cross-entropy (ignore_index).

    The transform weight is split (wta for the attention half, wtd for the decoder half)
    so both 128-lane-dense inputs feed straight in: no 64-lane concat intermediate.
    """
    h = (jnp.dot(a_ref[...].astype(jnp.bfloat16), wta_ref[...].astype(jnp.bfloat16),
                 preferred_element_type=jnp.float32)
         + jnp.dot(d_ref[...].astype(jnp.bfloat16), wtd_ref[...].astype(jnp.bfloat16),
                   preferred_element_type=jnp.float32)
         + bt_ref[...])
    h = jnp.maximum(h, 0.0)
    logits = (jnp.dot(h.astype(jnp.bfloat16), wp_ref[...].astype(jnp.bfloat16),
                      preferred_element_type=jnp.float32) + bp_ref[...])
    n, vp = logits.shape
    col = jax.lax.broadcasted_iota(jnp.int32, (n, vp), 1)
    # padded vocab columns must not contribute to the logsumexp
    logits = jnp.where(col < v_logical, logits, jnp.float32(-1e30))
    lbl = lbl_ref[...]                                              # (N, 1) int32
    m = jnp.max(logits, axis=1, keepdims=True)
    lse = jnp.log(jnp.sum(jnp.exp(logits - m), axis=1, keepdims=True)) + m
    picked = jnp.sum(jnp.where(col == lbl, logits, 0.0), axis=1, keepdims=True)
    valid = (lbl != pad_idx).astype(jnp.float32)                    # (N, 1)
    nll = (lse - picked) * valid
    total = jnp.sum(nll, axis=0, keepdims=True)                     # (1, 1)
    count = jnp.maximum(jnp.sum(valid, axis=0, keepdims=True), 1.0)
    loss_ref[...] = total / count


def pallas_ce_head(a, d, wta, wtd, bt, wp, bp, labels, *, v_logical, pad_idx):
    # TODO(synk): at production vocab sizes, tile over N ("parallel") and Vp
    # ("arbitrary", online logsumexp in scratch) instead of one full-logits block.
    N, Ea = a.shape
    Ed = d.shape[1]
    P = wta.shape[1]
    V = wp.shape[1]
    out = pl.pallas_call(
        functools.partial(_head_kernel, v_logical=v_logical, pad_idx=pad_idx),
        out_shape=jax.ShapeDtypeStruct((1, 1), jnp.float32),
        in_specs=[pl.BlockSpec((N, Ea), lambda: (0, 0)),
                  pl.BlockSpec((N, Ed), lambda: (0, 0)),
                  pl.BlockSpec((Ea, P), lambda: (0, 0)),
                  pl.BlockSpec((Ed, P), lambda: (0, 0)),
                  pl.BlockSpec((1, P), lambda: (0, 0)),
                  pl.BlockSpec((P, V), lambda: (0, 0)),
                  pl.BlockSpec((1, V), lambda: (0, 0)),
                  pl.BlockSpec((N, 1), lambda: (0, 0))],
        out_specs=pl.BlockSpec((1, 1), lambda: (0, 0)),
    )(a, d, wta, wtd, bt, wp, bp, labels)
    return out[0, 0]


# ------------------------------- model glue --------------------------------

def prepare_padded(sentences, word2ind, unk_idx, pad_idx):
    """preparePaddedBatch: (max_len, batch) int32, time-major."""
    m = max(len(s) for s in sentences)
    rows = [[word2ind.get(w, unk_idx) for w in s] + [pad_idx] * (m - len(s))
            for s in sentences]
    return jnp.array(rows, dtype=jnp.int32).T


def init_params(key, *, src_vocab, tgt_vocab, emb, H, Hp, D, Dp, A, Ap, E2, Ep,
                P, Pp, V, Vp):
    """Logical PyTorch-sized weights, zero-padded to lane-aligned (128) storage."""
    key_holder = [key]

    def randn(shape, scale=0.1):
        key_holder[0], sub = jax.random.split(key_holder[0])
        return (scale * jax.random.normal(sub, shape)).astype(jnp.float32)

    def pad_cols(x, cols):
        return jnp.pad(x, ((0, 0), (0, cols - x.shape[1])))

    def fused_w(in_dim, h_log, h_pad):
        # fused gate weights (in_dim, 4*h_pad), gate order i, f, g, o; padded cols zero
        return jnp.concatenate([pad_cols(randn((in_dim, h_log)), h_pad)
                                for _ in range(4)], axis=1)

    def fused_whh(h_log, h_pad):
        blocks = []
        for _ in range(4):
            blk = jnp.zeros((h_pad, h_pad), jnp.float32)
            blk = blk.at[:h_log, :h_log].set(randn((h_log, h_log)))
            blocks.append(blk)
        return jnp.concatenate(blocks, axis=1)

    def fused_b(h_log, h_pad):
        return jnp.concatenate([pad_cols(randn((1, h_log)), h_pad)
                                for _ in range(4)], axis=1)

    return {
        'src_embed': randn((src_vocab, emb)),
        'tgt_embed': randn((tgt_vocab, emb)),
        # bidirectional encoder LSTM, single layer; fwd|bwd fused along the output dim
        'enc_wih': jnp.concatenate([fused_w(emb, H, Hp), fused_w(emb, H, Hp)], axis=1),
        'enc_whh': jnp.concatenate([fused_whh(H, Hp), fused_whh(H, Hp)], axis=1),
        'enc_b':   jnp.concatenate([fused_b(H, Hp), fused_b(H, Hp)], axis=1),
        # decoder LSTM, single layer, hidden = 2*enc_h (lane-padded)
        'dec_wih': fused_w(emb, D, Dp),
        'dec_whh': fused_whh(D, Dp),
        'dec_b':   fused_b(D, Dp),
        # additive attention: We (with bias), Wd (no bias), v (no bias)
        'We_w': jnp.zeros((Ep, Ap), jnp.float32).at[:E2, :A].set(randn((E2, A))),
        'We_b': pad_cols(randn((1, A)), Ap),
        'Wd_w': jnp.zeros((Dp, Ap), jnp.float32).at[:D, :A].set(randn((D, A))),
        'Wd_b0': jnp.zeros((1, Ap), jnp.float32),
        'v_w':  pad_cols(randn((1, A)), Ap),
        # transform split into attention-half / decoder-half (zero rows for padded lanes)
        'trans_wa': jnp.zeros((Ep, Pp), jnp.float32).at[:E2, :P].set(randn((E2, P))),
        'trans_wd': jnp.zeros((Dp, Pp), jnp.float32).at[:D, :P].set(randn((D, P))),
        'trans_b': pad_cols(randn((1, P)), Pp),
        'proj_w': jnp.zeros((Pp, Vp), jnp.float32).at[:P, :V].set(randn((P, V))),
        'proj_b': pad_cols(randn((1, V)), Vp),
    }


def nmt_forward(params, src_tokens, src_lengths, tgt_tokens, tgt_lengths,
                tgt_pad_idx, cfg):
    """NMTmodel.forward: returns the scalar cross-entropy loss H."""
    H, Hp = cfg['H'], cfg['Hp']
    D, Dp = cfg['D'], cfg['Dp']
    Ap, Ep = cfg['Ap'], cfg['Ep']
    V = cfg['V']

    S, B = src_tokens.shape
    src_emb = jnp.take(params['src_embed'], src_tokens, axis=0)             # (S, B, emb)
    src_valid = (jnp.arange(S)[:, None] < src_lengths[None, :]).astype(jnp.float32)

    # --- bidirectional encoder: fwd+bwd input projection fused into ONE matmul ---
    emb_flat = src_emb.reshape(S * B, -1)
    xg_both = pallas_linear(emb_flat, params['enc_wih'],
                            params['enc_b']).reshape(S, B, 8 * Hp)
    h0 = jnp.zeros((B, Hp), jnp.float32)
    c0 = jnp.zeros((B, Hp), jnp.float32)
    src_mask = src_valid[:, :, None]
    out_both, hn_both, cn_both = lstm_scan(xg_both, src_mask, params['enc_whh'],
                                           h0, c0, hp=Hp, num_dirs=2,
                                           reverse_dir1=True)
    out_f, out_b = out_both[0], out_both[1]
    hf, hb = hn_both[0], hn_both[1]
    cf, cb = cn_both[0], cn_both[1]

    enc_logical = jnp.concatenate([out_f[..., :H], out_b[..., :H]], axis=-1)  # (S, B, 2H)
    enc_pad = jnp.pad(enc_logical, ((0, 0), (0, 0), (0, Ep - 2 * H)))         # (S, B, Ep)
    dec_h0 = jnp.pad(jnp.concatenate([hf[:, :H], hb[:, :H]], axis=-1),
                     ((0, 0), (0, Dp - 2 * H)))
    dec_c0 = jnp.pad(jnp.concatenate([cf[:, :H], cb[:, :H]], axis=-1),
                     ((0, 0), (0, Dp - 2 * H)))

    # --- decoder ---
    T = tgt_tokens.shape[0] - 1
    tgt_emb = jnp.take(params['tgt_embed'], tgt_tokens[:-1], axis=0)          # (T, B, emb)
    tgt_valid = (jnp.arange(T)[:, None] < tgt_lengths[None, :]).astype(jnp.float32)
    xg_d = pallas_linear(tgt_emb.reshape(T * B, -1), params['dec_wih'],
                         params['dec_b']).reshape(T, B, 4 * Dp)
    dec_all, _, _ = lstm_scan(xg_d, tgt_valid[:, :, None], params['dec_whh'],
                              dec_h0, dec_c0, hp=Dp, num_dirs=1,
                              reverse_dir1=False)
    dec_out = dec_all[0]                                                      # (T, B, Dp)

    # --- additive attention: We(enc) and Wd(dec) hoisted to single matmuls ---
    eproj = pallas_linear(enc_pad.reshape(S * B, Ep), params['We_w'],
                          params['We_b']).reshape(S, B, Ap)
    dproj = pallas_linear(dec_out.reshape(T * B, Dp), params['Wd_w'],
                          params['Wd_b0']).reshape(T, B, Ap)
    eproj_bsw = jnp.transpose(eproj, (1, 0, 2))                               # (B, S, Ap)
    enc_bse = jnp.transpose(enc_pad, (1, 0, 2))                               # (B, S, Ep)
    nmask = jnp.where(src_valid.T > 0.0, 0.0, -1e30).astype(jnp.float32)      # (B, S)
    attn = pallas_attention(eproj_bsw, enc_bse, dproj, params['v_w'], nmask)  # (T, B, Ep)

    # TODO(synk): dropout is treated as eval-mode identity (deterministic run).
    attn_flat = attn.reshape(T * B, Ep)                                       # lane-dense
    dec_flat = dec_out.reshape(T * B, Dp)                                     # lane-dense
    labels = tgt_tokens[1:].reshape(T * B, 1).astype(jnp.int32)
    loss = pallas_ce_head(attn_flat, dec_flat, params['trans_wa'], params['trans_wd'],
                          params['trans_b'], params['proj_w'], params['proj_b'], labels,
                          v_logical=V, pad_idx=tgt_pad_idx)
    return loss


# ---------------------------------- driver ---------------------------------

if __name__ == "__main__":
    wordEmbeddingSize = 16
    encoderHiddenSize = 16
    encoderLayers = 1
    decoderHiddenSize = 2 * encoderHiddenSize   # required by the module's init scheme
    decoderLayers = 1
    attentionHiddenSize = 32
    projectionTransformSize = 32
    LANE = 128                                  # lane-pad every feature dim to 128

    startToken, endToken, unkToken, padToken = '<S>', '</S>', '<UNK>', '<PAD>'
    src_w2i = {'<S>': 0, '</S>': 1, '<UNK>': 2, '<PAD>': 3,
               'ich': 4, 'mag': 5, 'katzen': 6, 'und': 7, 'hunde': 8, 'sehr': 9}
    tgt_w2i = {'<S>': 0, '</S>': 1, '<UNK>': 2, '<PAD>': 3,
               'i': 4, 'like': 5, 'cats': 6, 'and': 7, 'dogs': 8, 'very': 9, 'much': 10}

    source = [['ich', 'mag', 'katzen', 'und', 'hunde', 'sehr'],
              ['ich', 'mag', 'hunde', 'und']]
    target = [['<S>', 'i', 'like', 'cats', '</S>'],
              ['<S>', 'i', 'like', '</S>']]

    src_tokens = prepare_padded(source, src_w2i, src_w2i[unkToken], src_w2i[padToken])
    tgt_tokens = prepare_padded(target, tgt_w2i, tgt_w2i[unkToken], tgt_w2i[padToken])
    src_lengths = jnp.array([len(s) for s in source], jnp.int32)
    tgt_lengths = jnp.array([len(t) - 1 for t in target], jnp.int32)

    cfg = dict(
        emb=wordEmbeddingSize,
        H=encoderHiddenSize, Hp=LANE,
        D=decoderHiddenSize, Dp=LANE,
        A=attentionHiddenSize, Ap=LANE,
        E2=2 * encoderHiddenSize, Ep=LANE,
        P=projectionTransformSize, Pp=LANE,
        V=len(tgt_w2i), Vp=LANE,
    )

    params = init_params(jax.random.PRNGKey(0),
                         src_vocab=len(src_w2i), tgt_vocab=len(tgt_w2i),
                         emb=cfg['emb'], H=cfg['H'], Hp=cfg['Hp'],
                         D=cfg['D'], Dp=cfg['Dp'], A=cfg['A'], Ap=cfg['Ap'],
                         E2=cfg['E2'], Ep=cfg['Ep'], P=cfg['P'], Pp=cfg['Pp'],
                         V=cfg['V'], Vp=cfg['Vp'])

    loss = nmt_forward(params, src_tokens, src_lengths, tgt_tokens, tgt_lengths,
                       tgt_w2i[padToken], cfg)
    loss = jax.block_until_ready(loss)
    assert bool(jnp.isfinite(loss)), "loss is not finite"
    print("KERNEL_OK")
</pallas_src>

<mosaic_0001>
module attributes {stable_mosaic.version = 11 : i64} {
  func.func @_linear_kernel(%arg0: memref<12x16xf32, #tpu.memory_space<vmem>>, %arg1: memref<16x1024xf32, #tpu.memory_space<vmem>>, %arg2: memref<1x1024xf32, #tpu.memory_space<vmem>>, %arg3: memref<12x1024xf32, #tpu.memory_space<vmem>>) attributes {dimension_semantics = [], scalar_prefetch = 0 : i64, scratch_operands = 0 : i64, tpu.core_type = #tpu.core_type<tc>} {
    %c0 = arith.constant 0 : index
    %c0_0 = arith.constant 0 : index
    %0 = vector.load %arg0[%c0, %c0_0] : memref<12x16xf32, #tpu.memory_space<vmem>>, vector<12x16xf32>
    %1 = arith.truncf %0 : vector<12x16xf32> to vector<12x16xbf16>
    %c0_1 = arith.constant 0 : index
    %c0_2 = arith.constant 0 : index
    %2 = vector.load %arg1[%c0_1, %c0_2] : memref<16x1024xf32, #tpu.memory_space<vmem>>, vector<16x1024xf32>
    %3 = arith.truncf %2 : vector<16x1024xf32> to vector<16x1024xbf16>
    %cst = arith.constant dense<0.000000e+00> : vector<12x1024xf32>
    %4 = tpu.matmul %1, %3, %cst {dimension_numbers = #tpu.dot_dimension_numbers<[1], [0], [0], [1], [0, 0, 1, 1], [], []>} : vector<12x16xbf16>, vector<16x1024xbf16>, vector<12x1024xf32> -> vector<12x1024xf32>
    %c0_3 = arith.constant 0 : index
    %c0_4 = arith.constant 0 : index
    %5 = vector.load %arg2[%c0_3, %c0_4] : memref<1x1024xf32, #tpu.memory_space<vmem>>, vector<1x1024xf32>
    %6 = vector.broadcast %5 : vector<1x1024xf32> to vector<12x1024xf32>
    %7 = arith.addf %4, %6 : vector<12x1024xf32>
    %c0_5 = arith.constant 0 : index
    %c0_6 = arith.constant 0 : index
    %8 = vector.load %arg3[%c0_5, %c0_6] : memref<12x1024xf32, #tpu.memory_space<vmem>>, vector<12x1024xf32>
    tpu.vector_store %arg3[%c0_5, %c0_6], %7 {strides = array<i32>} : memref<12x1024xf32, #tpu.memory_space<vmem>>, vector<12x1024xf32>,
    return
  }
}

</mosaic_0001>

<llo_original>
// kernel: tpu_custom_call.1
$region0: #{tpu_custom_call.1}
  #allocation0 [shape = 'u32[]', space=smem, size = 0x4, offset = 0x4, fixed_abs, tag = 'smem constant byte address 0x4 - core index']
  #allocation1 [shape = 'u32[144,128]{1,0:T(1,128)}', space=vmem, size = 0x12000, scoped, tag = 'internal scratch']
  %s0 = inlined_call_operand.hbm [shape: f32[12,16], index: 0, kind: input, shape index: {}]
  %s1 = inlined_call_operand.hbm [shape: f32[16,1024], index: 1, kind: input, shape index: {}]
  %s2 = inlined_call_operand.hbm [shape: f32[1,1024], index: 2, kind: input, shape index: {}]
  %s3 = inlined_call_operand.hbm [shape: f32[12,1024], index: 3, kind: output, shape index: {}]
  %s4 = sld [smem:[#allocation0]]
  $region34: #{tpu_custom_call.1} parent=0
    _
  %s6 = ssub.s32 1, %s4
  %s7 = scalar_select 0, %s6, %s4
  $region1: #{tpu_custom_call.1} parent=0
    #allocation2 [shape = 'u8[8192]{0}', space=vmem, size = 0x2000, scoped, tag = 'input window, operand 0, single buffered']
    #allocation3 [shape = 's32[1]{0}', space=sflag, size = 0x4, scoped, tag = 'scoped memory for tpu_custom_call.1']
    #allocation4 [shape = 's32[1]{0}', space=sflag, size = 0x4, scoped, tag = 'scoped memory for tpu_custom_call.1']
    #allocation5 [shape = 'u8[65536]{0}', space=vmem, size = 0x10000, scoped, tag = 'input window, operand 1, single buffered']
    #allocation6 [shape = 's32[1]{0}', space=sflag, size = 0x4, scoped, tag = 'scoped memory for tpu_custom_call.1']
    #allocation7 [shape = 'u8[4096]{0}', space=vmem, size = 0x1000, scoped, tag = 'input window, operand 2, single buffered']
    #allocation8 [shape = 'u8[65536]{0}', space=vmem, size = 0x10000, scoped, tag = 'output window, operand 0, single buffered']
    %8 = vsyncpa [#allocation3], 0
    %9 = vsyncpa [#allocation6], 0
    %10 = vsyncpa [#allocation4], 0
    // Predicated region
    $region2: #{tpu_custom_call.1} parent=1 // pred_check
      _
    $region3: #{tpu_custom_call.1} parent=1 // pred_check_branch
      %12 = sbr.rel (0) target = $region5
    $region4: #{tpu_custom_call.1} parent=1 // pred_region
      %s14 = ssub.s32 256, 256
      %15 = vsyncadd [#allocation3], %s14
      %s16 = sshll.u32 [#allocation2], 4
      %s17 = int_to_ptr.vmem [resolvable:$true] %s16
      %22 = dma.hbm_to_vmem [thread:$0]  %s0, 256, %s17, [#allocation3], 128, 128, 8
    $region5: #{tpu_custom_call.1} parent=1 // pred_fallthru
      _
    // Predicated region
    $region6: #{tpu_custom_call.1} parent=1 // pred_check
      _
    $region7: #{tpu_custom_call.1} parent=1 // pred_check_branch
      %24 = sbr.rel (0) target = $region9
    $region8: #{tpu_custom_call.1} parent=1 // pred_region
      %s26 = ssub.s32 2048, 2048
      %27 = vsyncadd [#allocation6], %s26
      %s28 = sshll.u32 [#allocation5], 4
      %s29 = int_to_ptr.vmem [resolvable:$true] %s28
      %34 = dma.hbm_to_vmem [thread:$0]  %s1, 2048, %s29, [#allocation6], 1024, 1024, 64
    $region9: #{tpu_custom_call.1} parent=1 // pred_fallthru
      _
    // Predicated region
    $region10: #{tpu_custom_call.1} parent=1 // pred_check
      _
    $region11: #{tpu_custom_call.1} parent=1 // pred_check_branch
      %36 = sbr.rel (0) target = $region13
    $region12: #{tpu_custom_call.1} parent=1 // pred_region
      %s38 = ssub.s32 128, 128
      %39 = vsyncadd [#allocation6], %s38
      %s41 = sshll.u32 [#allocation7], 4
      %s42 = int_to_ptr.vmem [resolvable:$true] %s41
      %44 = dma.hbm_to_vmem [thread:$0]  %s2, 128, %s42, [#allocation6]
    $region13: #{tpu_custom_call.1} parent=1 // pred_fallthru
      _
    // Predicated region
    $region14: #{tpu_custom_call.1} parent=1 // pred_check
      _
    $region15: #{tpu_custom_call.1} parent=1 // pred_check_branch
      %46 = sbr.rel (0) target = $region17
    $region16: #{tpu_custom_call.1} parent=1 // pred_region
      %47 = dma.done [#allocation3], 256
    $region17: #{tpu_custom_call.1} parent=1 // pred_fallthru
      _
    // Predicated region
    $region18: #{tpu_custom_call.1} parent=1 // pred_check
      _
    $region19: #{tpu_custom_call.1} parent=1 // pred_check_branch
      %49 = sbr.rel (0) target = $region21
    $region20: #{tpu_custom_call.1} parent=1 // pred_region
      %50 = dma.done [#allocation6], 2048
    $region21: #{tpu_custom_call.1} parent=1 // pred_fallthru
      _
    // Predicated region
    $region22: #{tpu_custom_call.1} parent=1 // pred_check
      _
    $region23: #{tpu_custom_call.1} parent=1 // pred_check_branch
      %52 = sbr.rel (0) target = $region25
    $region24: #{tpu_custom_call.1} parent=1 // pred_region
      %53 = dma.done [#allocation6], 128
    $region25: #{tpu_custom_call.1} parent=1 // pred_fallthru
      _
    %v55 = vld [vmem:[#allocation2] sm:$0xff]
    %v56 = vld [vmem:[#allocation2 + $0x8] sm:$0xf]
    %v57 = vpack.c.bf16 %v56, %v55
    %v58 = vld [vmem:[#allocation5] sm:$0xff]
    %v59 = vld [vmem:[#allocation5 + $0x8] sm:$0xff]
    %v60 = vld [vmem:[#allocation5 + $0x10] sm:$0xff]
    %v61 = vld [vmem:[#allocation5 + $0x18] sm:$0xff]
    %v62 = vld [vmem:[#allocation5 + $0x20] sm:$0xff]
    %v63 = vld [vmem:[#allocation5 + $0x28] sm:$0xff]
    %v64 = vld [vmem:[#allocation5 + $0x30] sm:$0xff]
    %v65 = vld [vmem:[#allocation5 + $0x38] sm:$0xff]
    %v66 = vld [vmem:[#allocation5 + $0x40] sm:$0xff]
    %v67 = vld [vmem:[#allocation5 + $0x48] sm:$0xff]
    %v68 = vld [vmem:[#allocation5 + $0x50] sm:$0xff]
    %v69 = vld [vmem:[#allocation5 + $0x58] sm:$0xff]
    %v70 = vld [vmem:[#allocation5 + $0x60] sm:$0xff]
    %v71 = vld [vmem:[#allocation5 + $0x68] sm:$0xff]
    %v72 = vld [vmem:[#allocation5 + $0x70] sm:$0xff]
    %v73 = vld [vmem:[#allocation5 + $0x78] sm:$0xff]
    %v74 = vpack.c.bf16 %v66, %v58
    %v75 = vpack.c.bf16 %v67, %v59
    %v76 = vpack.c.bf16 %v68, %v60
    %v77 = vpack.c.bf16 %v69, %v61
    %v78 = vpack.c.bf16 %v70, %v62
    %v79 = vpack.c.bf16 %v71, %v63
    %v80 = vpack.c.bf16 %v72, %v64
    %v81 = vpack.c.bf16 %v73, %v65
    %v82 = vld [vmem:[#allocation7] sm:$0xff]
    %v84 = vlaneseq
    %v85 = vshrl.u32 %v84, 7
    %v86 = vsub.s32 0, %v85
    %v87 = vrot.slane %v82, %v86
    %v88 = vlaneseq
    %v89 = vshrl.u32 %v88, 7
    %v90 = vsub.s32 1, %v89
    %v91 = vrot.slane %v82, %v90
    %v92 = vlaneseq
    %v93 = vshrl.u32 %v92, 7
    %v94 = vsub.s32 2, %v93
    %v95 = vrot.slane %v82, %v94
    %v96 = vlaneseq
    %v97 = vshrl.u32 %v96, 7
    %v98 = vsub.s32 3, %v97
    %v99 = vrot.slane %v82, %v98
    %v100 = vlaneseq
    %v101 = vshrl.u32 %v100, 7
    %v102 = vsub.s32 4, %v101
    %v103 = vrot.slane %v82, %v102
    %v104 = vlaneseq
    %v105 = vshrl.u32 %v104, 7
    %v106 = vsub.s32 5, %v105
    %v107 = vrot.slane %v82, %v106
    %v108 = vlaneseq
    %v109 = vshrl.u32 %v108, 7
    %v110 = vsub.s32 6, %v109
    %v111 = vrot.slane %v82, %v110
    %v112 = vlaneseq
    %v113 = vshrl.u32 %v112, 7
    %v114 = vsub.s32 7, %v113
    %v115 = vrot.slane %v82, %v114
    %vm124 = vcmask 130048
    %v126 = vsel %vm124, %v57, 0
    %128 = vmatprep.subr.bf16.mxu0 0
    %129 = vmatpush1.bf16.msra.mxu0 0
    %130 = vmatprep.subr.bf16.mxu0 0
    %131 = vmatpush1.bf16.msra.mxu0 0
    %132 = vmatprep.subr.bf16.mxu0 0
    %133 = vmatpush1.bf16.msra.mxu0 0
    %134 = vmatprep.subr.bf16.mxu0 0
    %135 = vmatpush1.bf16.msra.mxu0 0
    %136 = vmatprep.subr.bf16.mxu0 0
    %137 = vmatpush1.bf16.msra.mxu0 0
    %138 = vmatprep.subr.bf16.mxu0 0
    %139 = vmatpush1.bf16.msra.mxu0 0
    %140 = vmatprep.subr.bf16.mxu0 0
    %141 = vmatpush1.bf16.msra.mxu0 0
    %142 = vmatprep.subr.bf16.mxu0 %v75
    %143 = vmatpush1.bf16.msra.mxu0 %v74
    %144 = vmatprep.subr.bf16.mxu0 0
    %145 = vmatpush2.bf16.msra.mxu0 0
    %146 = vmatprep.subr.bf16.mxu0 0
    %147 = vmatpush2.bf16.msra.mxu0 0
    %148 = vmatprep.subr.bf16.mxu0 0
    %149 = vmatpush2.bf16.msra.mxu0 0
    %150 = vmatprep.subr.bf16.mxu0 0
    %151 = vmatpush2.bf16.msra.mxu0 0
    %152 = vmatprep.subr.bf16.mxu0 0
    %153 = vmatpush2.bf16.msra.mxu0 0
    %154 = vmatprep.subr.bf16.mxu0 0
    %155 = vmatpush2.bf16.msra.mxu0 0
    %156 = vmatprep.subr.bf16.mxu0 0
    %157 = vmatpush2.bf16.msra.mxu0 0
    %158 = vmatprep.subr.bf16.mxu0 0
    %159 = vmatpush2.bf16.msra.mxu0 0
    %160 = vmatprep.mubr.bf16.mxu0 0
    %161 = vmatmul.mubr.bf16.gmra.mxu0 %v126
    %v162 = vpop.f32.mrf.mxu0
    %v163 = vadd.f32 %v87, %v162
    %v164 = vpop.f32.mrf.mxu0
    %v165 = vadd.f32 %v91, %v164
    %v166 = vpop.f32.mrf.mxu0
    %v167 = vadd.f32 %v87, %v166
    %v168 = vpop.f32.mrf.mxu0
    %v169 = vadd.f32 %v91, %v168
    %170 = vdwg.mxu0
    %171 = vmatprep.subr.bf16.mxu0 0
    %172 = vmatpush1.bf16.msra.mxu0 0
    %173 = vmatprep.subr.bf16.mxu0 0
    %174 = vmatpush1.bf16.msra.mxu0 0
    %175 = vmatprep.subr.bf16.mxu0 0
    %176 = vmatpush1.bf16.msra.mxu0 0
    %177 = vmatprep.subr.bf16.mxu0 0
    %178 = vmatpush1.bf16.msra.mxu0 0
    %179 = vmatprep.subr.bf16.mxu0 0
    %180 = vmatpush1.bf16.msra.mxu0 0
    %181 = vmatprep.subr.bf16.mxu0 0
    %182 = vmatpush1.bf16.msra.mxu0 0
    %183 = vmatprep.subr.bf16.mxu0 0
    %184 = vmatpush1.bf16.msra.mxu0 0
    %185 = vmatprep.subr.bf16.mxu0 %v77
    %186 = vmatpush1.bf16.msra.mxu0 %v76
    %187 = vmatprep.subr.bf16.mxu0 0
    %188 = vmatpush2.bf16.msra.mxu0 0
    %189 = vmatprep.subr.bf16.mxu0 0
    %190 = vmatpush2.bf16.msra.mxu0 0
    %191 = vmatprep.subr.bf16.mxu0 0
    %192 = vmatpush2.bf16.msra.mxu0 0
    %193 = vmatprep.subr.bf16.mxu0 0
    %194 = vmatpush2.bf16.msra.mxu0 0
    %195 = vmatprep.subr.bf16.mxu0 0
    %196 = vmatpush2.bf16.msra.mxu0 0
    %197 = vmatprep.subr.bf16.mxu0 0
    %198 = vmatpush2.bf16.msra.mxu0 0
    %199 = vmatprep.subr.bf16.mxu0 0
    %200 = vmatpush2.bf16.msra.mxu0 0
    %201 = vmatprep.subr.bf16.mxu0 0
    %202 = vmatpush2.bf16.msra.mxu0 0
    %203 = vmatprep.mubr.bf16.mxu0 0
    %204 = vmatmul.mubr.bf16.gmra.mxu0 %v126
    %v205 = vpop.f32.mrf.mxu0
    %v206 = vadd.f32 %v95, %v205
    %v207 = vpop.f32.mrf.mxu0
    %v208 = vadd.f32 %v99, %v207
    %v209 = vpop.f32.mrf.mxu0
    %v210 = vadd.f32 %v95, %v209
    %v211 = vpop.f32.mrf.mxu0
    %v212 = vadd.f32 %v99, %v211
    %213 = vdwg.mxu0
    %214 = vmatprep.subr.bf16.mxu0 0
    %215 = vmatpush1.bf16.msra.mxu0 0
    %216 = vmatprep.subr.bf16.mxu0 0
    %217 = vmatpush1.bf16.msra.mxu0 0
    %218 = vmatprep.subr.bf16.mxu0 0
    %219 = vmatpush1.bf16.msra.mxu0 0
    %220 = vmatprep.subr.bf16.mxu0 0
    %221 = vmatpush1.bf16.msra.mxu0 0
    %222 = vmatprep.subr.bf16.mxu0 0
    %223 = vmatpush1.bf16.msra.mxu0 0
    %224 = vmatprep.subr.bf16.mxu0 0
    %225 = vmatpush1.bf16.msra.mxu0 0
    %226 = vmatprep.subr.bf16.mxu0 0
    %227 = vmatpush1.bf16.msra.mxu0 0
    %228 = vmatprep.subr.bf16.mxu0 %v79
    %229 = vmatpush1.bf16.msra.mxu0 %v78
    %230 = vmatprep.subr.bf16.mxu0 0
    %231 = vmatpush2.bf16.msra.mxu0 0
    %232 = vmatprep.subr.bf16.mxu0 0
    %233 = vmatpush2.bf16.msra.mxu0 0
    %234 = vmatprep.subr.bf16.mxu0 0
    %235 = vmatpush2.bf16.msra.mxu0 0
    %236 = vmatprep.subr.bf16.mxu0 0
    %237 = vmatpush2.bf16.msra.mxu0 0
    %238 = vmatprep.subr.bf16.mxu0 0
    %239 = vmatpush2.bf16.msra.mxu0 0
    %240 = vmatprep.subr.bf16.mxu0 0
    %241 = vmatpush2.bf16.msra.mxu0 0
    %242 = vmatprep.subr.bf16.mxu0 0
    %243 = vmatpush2.bf16.msra.mxu0 0
    %244 = vmatprep.subr.bf16.mxu0 0
    %245 = vmatpush2.bf16.msra.mxu0 0
    %246 = vmatprep.mubr.bf16.mxu0 0
    %247 = vmatmul.mubr.bf16.gmra.mxu0 %v126
    %v248 = vpop.f32.mrf.mxu0
    %v249 = vadd.f32 %v103, %v248
    %v250 = vpop.f32.mrf.mxu0
    %v251 = vadd.f32 %v107, %v250
    %v252 = vpop.f32.mrf.mxu0
    %v253 = vadd.f32 %v103, %v252
    %v254 = vpop.f32.mrf.mxu0
    %v255 = vadd.f32 %v107, %v254
    %256 = vdwg.mxu0
    %257 = vmatprep.subr.bf16.mxu0 0
    %258 = vmatpush1.bf16.msra.mxu0 0
    %259 = vmatprep.subr.bf16.mxu0 0
    %260 = vmatpush1.bf16.msra.mxu0 0
    %261 = vmatprep.subr.bf16.mxu0 0
    %262 = vmatpush1.bf16.msra.mxu0 0
    %263 = vmatprep.subr.bf16.mxu0 0
    %264 = vmatpush1.bf16.msra.mxu0 0
    %265 = vmatprep.subr.bf16.mxu0 0
    %266 = vmatpush1.bf16.msra.mxu0 0
    %267 = vmatprep.subr.bf16.mxu0 0
    %268 = vmatpush1.bf16.msra.mxu0 0
    %269 = vmatprep.subr.bf16.mxu0 0
    %270 = vmatpush1.bf16.msra.mxu0 0
    %271 = vmatprep.subr.bf16.mxu0 %v81
    %272 = vmatpush1.bf16.msra.mxu0 %v80
    %273 = vmatprep.subr.bf16.mxu0 0
    %274 = vmatpush2.bf16.msra.mxu0 0
    %275 = vmatprep.subr.bf16.mxu0 0
    %276 = vmatpush2.bf16.msra.mxu0 0
    %277 = vmatprep.subr.bf16.mxu0 0
    %278 = vmatpush2.bf16.msra.mxu0 0
    %279 = vmatprep.subr.bf16.mxu0 0
    %280 = vmatpush2.bf16.msra.mxu0 0
    %281 = vmatprep.subr.bf16.mxu0 0
    %282 = vmatpush2.bf16.msra.mxu0 0
    %283 = vmatprep.subr.bf16.mxu0 0
    %284 = vmatpush2.bf16.msra.mxu0 0
    %285 = vmatprep.subr.bf16.mxu0 0
    %286 = vmatpush2.bf16.msra.mxu0 0
    %287 = vmatprep.subr.bf16.mxu0 0
    %288 = vmatpush2.bf16.msra.mxu0 0
    %289 = vmatprep.mubr.bf16.mxu0 0
    %290 = vmatmul.mubr.bf16.gmra.mxu0 %v126
    %v291 = vpop.f32.mrf.mxu0
    %v292 = vadd.f32 %v111, %v291
    %v293 = vpop.f32.mrf.mxu0
    %v294 = vadd.f32 %v115, %v293
    %v295 = vpop.f32.mrf.mxu0
    %v296 = vadd.f32 %v111, %v295
    %v297 = vpop.f32.mrf.mxu0
    %v298 = vadd.f32 %v115, %v297
    %299 = vdwg.mxu0
    %300 = vst [vmem:[#allocation8] sm:$0xff] %v163
    %301 = vst [vmem:[#allocation8 + $0x8] sm:$0xff] %v165
    %302 = vst [vmem:[#allocation8 + $0x10] sm:$0xff] %v206
    %303 = vst [vmem:[#allocation8 + $0x18] sm:$0xff] %v208
    %304 = vst [vmem:[#allocation8 + $0x20] sm:$0xff] %v249
    %305 = vst [vmem:[#allocation8 + $0x28] sm:$0xff] %v251
    %306 = vst [vmem:[#allocation8 + $0x30] sm:$0xff] %v292
    %307 = vst [vmem:[#allocation8 + $0x38] sm:$0xff] %v294
    %308 = vst [vmem:[#allocation8 + $0x40] sm:$0xf] %v167
    %309 = vst [vmem:[#allocation8 + $0x48] sm:$0xf] %v169
    %310 = vst [vmem:[#allocation8 + $0x50] sm:$0xf] %v210
    %311 = vst [vmem:[#allocation8 + $0x58] sm:$0xf] %v212
    %312 = vst [vmem:[#allocation8 + $0x60] sm:$0xf] %v253
    %313 = vst [vmem:[#allocation8 + $0x68] sm:$0xf] %v255
    %314 = vst [vmem:[#allocation8 + $0x70] sm:$0xf] %v296
    %315 = vst [vmem:[#allocation8 + $0x78] sm:$0xf] %v298
    // Predicated region
    $region26: #{tpu_custom_call.1} parent=1 // pred_check
      _
    $region27: #{tpu_custom_call.1} parent=1 // pred_check_branch
      %317 = sbr.rel (0) target = $region29
    $region28: #{tpu_custom_call.1} parent=1 // pred_region
      %s319 = ssub.s32 2048, 2048
      %320 = vsyncadd [#allocation4], %s319
      %s321 = sshll.u32 [#allocation8], 4
      %s322 = int_to_ptr.vmem [resolvable:$true] %s321
      %327 = dma.vmem_to_hbm [thread:$0]  %s322, 2048, %s3, [#allocation4], 1024, 1024, 64
    $region29: #{tpu_custom_call.1} parent=1 // pred_fallthru
      _
    // Predicated region
    $region30: #{tpu_custom_call.1} parent=1 // pred_check
      _
    $region31: #{tpu_custom_call.1} parent=1 // pred_check_branch
      %329 = sbr.rel (0) target = $region33
    $region32: #{tpu_custom_call.1} parent=1 // pred_region
      %330 = dma.done [#allocation4], 2048
    $region33: #{tpu_custom_call.1} parent=1 // pred_fallthru
      _
    %331 = vsyncpa [#allocation3], 1
    %332 = vsyncpa [#allocation6], 1
    %333 = vsyncpa [#allocation4], 1

</llo_original>
